<compile_context>
chip_gen: v7x
topology: tpu7x:2x2x1
jax: 0.10.0
libtpu: 0.0.40
codegen_flags: <defaults>
</compile_context>

<pallas_src>
import math

import jax
import jax.numpy as jnp
from jax.experimental import pallas as pl
from jax.experimental.pallas import tpu as pltpu


def _copy_kernel(x_ref, o_ref):
    # Pure lane-dense 2-D copy: straight vld/vst, no in-kernel relayout.
    o_ref[...] = x_ref[...]


def _round_up(v, m):
    return ((v + m - 1) // m) * m


def _round_down(v, m):
    return (v // m) * m


def flatten(x):
    """Preferred Flatten: metadata-only reshape, zero HBM round trip."""
    return jnp.reshape(x, (x.shape[0], -1))


def flatten_pallas(
    x,
    *,
    target_block_bytes=2 * 1024 * 1024,   # per-buffer cap (padded bytes)
    small_input_bytes=2 * 1024 * 1024,    # below this, just reshape
    force_kernel=False,
):
    """Pallas-kernel Flatten (materializing copy) for fusion/benchmark use."""
    b = x.shape[0]
    flat = math.prod(x.shape[1:]) if x.ndim > 1 else 1
    itemsize = jnp.dtype(x.dtype).itemsize
    total = b * flat
    total_bytes = total * itemsize

    # Fast path: tiny inputs are pure overhead through a copy kernel.
    if total_bytes <= small_input_bytes and not force_kernel:
        return flatten(x)

    LANE = 128
    # Native sublane pack per dtype: f32 -> 8, bf16 -> 16, int8 -> 32.
    sublane = max(8, 32 // itemsize)

    if total % LANE == 0:
        # ---- Dense-slab path: (R, C) with C a multiple of 128. ----
        C = LANE
        for cand in (1024, 512, 256, 128):
            if total % cand == 0:
                C = cand
                break
        R = total // C
        x2 = jnp.reshape(x, (R, C))  # row-major order preserved

        # Row block sized so one block is ~target_block_bytes (padded == raw
        # here, since rb is a sublane multiple and C is lane-dense).
        rb = _round_down(
            max(target_block_bytes // (C * itemsize), sublane), sublane
        )
        rb = max(rb, sublane)
        if rb >= R:
            # A single block would cover everything: split roughly in half
            # (sublane-aligned) so v7x's two TensorCores each get a block
            # when the row extent allows it; otherwise take the full extent.
            half = _round_up(pl.cdiv(R, 2), sublane)
            rb = half if half < R else R

        grid = (pl.cdiv(R, rb),)  # partial tail block is masked by Pallas

        out = pl.pallas_call(
            _copy_kernel,
            out_shape=jax.ShapeDtypeStruct((R, C), x.dtype),
            grid=grid,
            in_specs=[pl.BlockSpec((rb, C), lambda i: (i, 0))],
            out_specs=pl.BlockSpec((rb, C), lambda i: (i, 0)),
            compiler_params=pltpu.CompilerParams(
                # Independent copy blocks: v7x's 2 TCs split the work;
                # harmless on v5e/v6e (1 TC).
                dimension_semantics=("parallel",),
            ),
        )(x2)
        return jnp.reshape(out, (b, flat))

    # ---- Fallback: total not 128-aligned. Tile (B, flat) on both axes. ----
    x2 = jnp.reshape(x, (b, flat))

    if b <= sublane:
        rb = b                                   # full row extent (legal)
    else:
        rb = _round_down(min(b, 8 * sublane), sublane)
    padded_rows = _round_up(rb, sublane)

    if flat < LANE:
        cb = flat                                # full lane extent (legal)
    else:
        cb = _round_down(
            max(target_block_bytes // (padded_rows * itemsize), LANE), LANE
        )
        cb = min(cb, _round_down(flat, LANE))    # keep block <= array dim
        cb = max(cb, LANE)

    grid = (pl.cdiv(b, rb), pl.cdiv(flat, cb))   # tails masked by Pallas

    return pl.pallas_call(
        _copy_kernel,
        out_shape=jax.ShapeDtypeStruct((b, flat), x.dtype),
        grid=grid,
        in_specs=[pl.BlockSpec((rb, cb), lambda i, j: (i, j))],
        out_specs=pl.BlockSpec((rb, cb), lambda i, j: (i, j)),
        compiler_params=pltpu.CompilerParams(
            dimension_semantics=("parallel", "parallel"),
        ),
    )(x2)


if __name__ == "__main__":
    k0, k1, k2 = jax.random.split(jax.random.PRNGKey(0), 3)

    # Primary small NCHW input consistent with typical use after convs.
    x_small = jax.random.normal(k0, (2, 4, 16, 16), dtype=jnp.float32)
    # Exercises the multi-block slab path with a masked partial tail
    # (total = 2*40*24*24 = 46080 = 45 * 1024 -> R=45, rb=24, grid=2).
    x_mid = jax.random.normal(k1, (2, 40, 24, 24), dtype=jnp.float32)
    # Exercises the non-128-aligned fallback (total = 210).
    x_odd = jax.random.normal(k2, (2, 3, 7, 5), dtype=jnp.float32)

    for x in (x_small, x_mid, x_odd):
        ref = jnp.reshape(x, (x.shape[0], -1))

        out_fast = jax.block_until_ready(flatten(x))
        out_kern = jax.block_until_ready(flatten_pallas(x, force_kernel=True))

        for out in (out_fast, out_kern):
            assert out.shape == ref.shape, (out.shape, ref.shape)
            assert out.dtype == ref.dtype, (out.dtype, ref.dtype)
            assert bool(jnp.array_equal(out, ref)), "flatten mismatch vs reference"

    print("KERNEL_OK")
</pallas_src>

<mosaic_0001>
module attributes {stable_mosaic.version = 11 : i64} {
  func.func @_copy_kernel(%arg0: i32, %arg1: memref<2x1024xf32, #tpu.memory_space<vmem>>, %arg2: memref<2x1024xf32, #tpu.memory_space<vmem>>) attributes {dimension_semantics = [#tpu.dimension_semantics<parallel>], iteration_bounds = array<i64: 1>, scalar_prefetch = 0 : i64, scratch_operands = 0 : i64, tpu.core_type = #tpu.core_type<tc>, window_params = [{transform_indices = @transform_0, window_bounds = array<i64: 2, 1024>}, {transform_indices = @transform_1, window_bounds = array<i64: 2, 1024>}]} {
    %c0 = arith.constant 0 : index
    %c0_0 = arith.constant 0 : index
    %0 = vector.load %arg1[%c0, %c0_0] : memref<2x1024xf32, #tpu.memory_space<vmem>>, vector<2x1024xf32>
    %c0_1 = arith.constant 0 : index
    %c0_2 = arith.constant 0 : index
    %1 = vector.load %arg2[%c0_1, %c0_2] : memref<2x1024xf32, #tpu.memory_space<vmem>>, vector<2x1024xf32>
    tpu.vector_store %arg2[%c0_1, %c0_2], %0 {strides = array<i32>} : memref<2x1024xf32, #tpu.memory_space<vmem>>, vector<2x1024xf32>,
    return
  }
  func.func @transform_0(%arg0: i32) -> (i32, i32) {
    %c0_i32 = arith.constant 0 : i32
    %c0_i32_0 = arith.constant 0 : i32
    return %arg0, %c0_i32 : i32, i32
  }
  func.func @transform_1(%arg0: i32) -> (i32, i32) {
    %c0_i32 = arith.constant 0 : i32
    %c0_i32_0 = arith.constant 0 : i32
    return %arg0, %c0_i32 : i32, i32
  }
}

</mosaic_0001>

<llo_original>
// kernel: tpu_custom_call.1
$region0: #{tpu_custom_call.1}
  #allocation0 [shape = 'u32[]', space=smem, size = 0x4, offset = 0x4, fixed_abs, tag = 'smem constant byte address 0x4 - core index']
  #allocation1 [shape = 'u32[144,128]{1,0:T(1,128)}', space=vmem, size = 0x12000, scoped, tag = 'internal scratch']
  %s0 = inlined_call_operand.hbm [shape: f32[2,1024], index: 0, kind: input, shape index: {}]
  %s1 = inlined_call_operand.hbm [shape: f32[2,1024], index: 1, kind: output, shape index: {}]
  %s2 = sld [smem:[#allocation0]]
  $region18: #{tpu_custom_call.1} parent=0
    _
  %s4 = ssub.s32 1, %s2
  %s5 = scalar_select 0, %s4, %s2
  $region1: #{tpu_custom_call.1} parent=0
    #allocation2 [shape = 'u8[8192]{0}', space=vmem, size = 0x2000, scoped, tag = 'input window, operand 0, single buffered']
    #allocation3 [shape = 's32[1]{0}', space=sflag, size = 0x4, scoped, tag = 'scoped memory for tpu_custom_call.1']
    #allocation4 [shape = 's32[1]{0}', space=sflag, size = 0x4, scoped, tag = 'scoped memory for tpu_custom_call.1']
    #allocation5 [shape = 'u8[8192]{0}', space=vmem, size = 0x2000, scoped, tag = 'output window, operand 0, single buffered']
    %6 = vsyncpa [#allocation3], 0
    %7 = vsyncpa [#allocation4], 0
    // Predicated region
    $region2: #{tpu_custom_call.1} parent=1 // pred_check
      _
    $region3: #{tpu_custom_call.1} parent=1 // pred_check_branch
      %9 = sbr.rel (0) target = $region5
    $region4: #{tpu_custom_call.1} parent=1 // pred_region
      %s11 = ssub.s32 256, 256
      %12 = vsyncadd [#allocation3], %s11
      %s14 = sshll.u32 [#allocation2], 4
      %s15 = int_to_ptr.vmem [resolvable:$true] %s14
      %17 = dma.hbm_to_vmem [thread:$0]  %s0, 256, %s15, [#allocation3]
    $region5: #{tpu_custom_call.1} parent=1 // pred_fallthru
      _
    // Predicated region
    $region6: #{tpu_custom_call.1} parent=1 // pred_check
      _
    $region7: #{tpu_custom_call.1} parent=1 // pred_check_branch
      %19 = sbr.rel (0) target = $region9
    $region8: #{tpu_custom_call.1} parent=1 // pred_region
      %20 = dma.done [#allocation3], 256
    $region9: #{tpu_custom_call.1} parent=1 // pred_fallthru
      _
    %v21 = vld [vmem:[#allocation2] sm:$0xff]
    %v22 = vld [vmem:[#allocation2 + $0x8] sm:$0xff]
    %23 = vst [vmem:[#allocation5] sm:$0xff] %v21
    %24 = vst [vmem:[#allocation5 + $0x8] sm:$0xff] %v22
    // Predicated region
    $region10: #{tpu_custom_call.1} parent=1 // pred_check
      _
    $region11: #{tpu_custom_call.1} parent=1 // pred_check_branch
      %26 = sbr.rel (0) target = $region13
    $region12: #{tpu_custom_call.1} parent=1 // pred_region
      %s28 = ssub.s32 256, 256
      %29 = vsyncadd [#allocation4], %s28
      %s31 = sshll.u32 [#allocation5], 4
      %s32 = int_to_ptr.vmem [resolvable:$true] %s31
      %34 = dma.vmem_to_hbm [thread:$0]  %s32, 256, %s1, [#allocation4]
    $region13: #{tpu_custom_call.1} parent=1 // pred_fallthru
      _
    // Predicated region
    $region14: #{tpu_custom_call.1} parent=1 // pred_check
      _
    $region15: #{tpu_custom_call.1} parent=1 // pred_check_branch
      %36 = sbr.rel (0) target = $region17
    $region16: #{tpu_custom_call.1} parent=1 // pred_region
      %37 = dma.done [#allocation4], 256
    $region17: #{tpu_custom_call.1} parent=1 // pred_fallthru
      _
    %38 = vsyncpa [#allocation3], 1
    %39 = vsyncpa [#allocation4], 1

</llo_original>
